<compile_context>
chip_gen: v7x
topology: tpu7x:2x2x1
jax: 0.10.0
libtpu: 0.0.40
codegen_flags: <defaults>
</compile_context>

<pallas_src>
import functools
import math

import jax
import jax.numpy as jnp
from jax.experimental import pallas as pl
from jax.experimental.pallas import tpu as pltpu


# ----------------------------------------------------------------------------
# Kernel
# ----------------------------------------------------------------------------
def transformer_head_kernel(x_ref, wqkv_ref, bqkv_ref, wproj_ref, bproj_ref,
                            out_ref, prob_ref, *, head_dim):
    bb, T, C = x_ref.shape
    scale = 1.0 / math.sqrt(head_dim)

    x = x_ref[...].astype(jnp.float32)                       # (bb, T, C)

    # ---- fused QKV projection: one MXU GEMM, batch folded into M -----------
    x2d = x.reshape(bb * T, C)
    qkv = jnp.dot(x2d, wqkv_ref[...],
                  preferred_element_type=jnp.float32) + bqkv_ref[...]
    qkv = qkv.reshape(bb, T, 3 * head_dim)
    q = qkv[..., :head_dim]
    k = qkv[..., head_dim:2 * head_dim]
    v = qkv[..., 2 * head_dim:]

    # ---- scaled dot-product attention (per image, f32 throughout) ----------
    att = jnp.einsum('bqd,bkd->bqk', q, k,
                     preferred_element_type=jnp.float32) * scale
    p = jax.nn.softmax(att, axis=-1)
    prob_ref[...] = p.astype(prob_ref.dtype)                 # single slab store

    sa = jnp.einsum('bqk,bkd->bqd', p, v,
                    preferred_element_type=jnp.float32)      # (bb, T, head_dim)

    # ---- output projection --------------------------------------------------
    out = jnp.dot(sa.reshape(bb * T, head_dim), wproj_ref[...],
                  preferred_element_type=jnp.float32) + bproj_ref[...]
    out_ref[...] = out.reshape(bb, T, C).astype(out_ref.dtype)


# ----------------------------------------------------------------------------
# Wrapper
# ----------------------------------------------------------------------------
def transformer_head_forward(x, params, *, head_dim, batch_block=1):
    """x: (B, T, C) -> (sa_out (B, T, C), sa_prob (B, T, T))."""
    B, T, C = x.shape
    bb = batch_block
    assert B % bb == 0, "batch_block must divide the batch"
    w_qkv, b_qkv = params["w_qkv"], params["b_qkv"]
    w_proj, b_proj = params["w_proj"], params["b_proj"]

    kernel = functools.partial(transformer_head_kernel, head_dim=head_dim)
    out, prob = pl.pallas_call(
        kernel,
        out_shape=(
            jax.ShapeDtypeStruct((B, T, C), x.dtype),
            jax.ShapeDtypeStruct((B, T, T), jnp.float32),
        ),
        grid=(B // bb,),
        in_specs=[
            pl.BlockSpec((bb, T, C), lambda i: (i, 0, 0)),
            pl.BlockSpec(w_qkv.shape, lambda i: (0, 0)),
            pl.BlockSpec(b_qkv.shape, lambda i: (0, 0)),
            pl.BlockSpec(w_proj.shape, lambda i: (0, 0)),
            pl.BlockSpec(b_proj.shape, lambda i: (0, 0)),
        ],
        out_specs=(
            pl.BlockSpec((bb, T, C), lambda i: (i, 0, 0)),
            pl.BlockSpec((bb, T, T), lambda i: (i, 0, 0)),
        ),
        compiler_params=pltpu.CompilerParams(
            dimension_semantics=("parallel",)),     # shards batch across TCs on v7x
    )(x, w_qkv, b_qkv, w_proj, b_proj)
    return out, prob


# ----------------------------------------------------------------------------
# Pure-JAX reference (mirrors the PyTorch forward) for correctness checking
# ----------------------------------------------------------------------------
def transformer_head_reference(x, params, *, head_dim):
    qkv = jnp.einsum('btc,cd->btd', x, params["w_qkv"]) + params["b_qkv"]
    q = qkv[..., :head_dim]
    k = qkv[..., head_dim:2 * head_dim]
    v = qkv[..., 2 * head_dim:]
    att = jnp.einsum('bqd,bkd->bqk', q, k) * (1.0 / math.sqrt(head_dim))
    p = jax.nn.softmax(att, axis=-1)
    sa = jnp.einsum('bqk,bkd->bqd', p, v)
    out = jnp.einsum('btd,dc->btc', sa, params["w_proj"]) + params["b_proj"]
    return out, p


def init_params(key, *, embed_dim, head_dim):
    # nn.Linear weights stored pre-transposed to (in, out).
    k1, k2, k3, k4 = jax.random.split(key, 4)
    std_qkv = 1.0 / math.sqrt(embed_dim)
    std_proj = 1.0 / math.sqrt(head_dim)
    return {
        "w_qkv": std_qkv * jax.random.normal(k1, (embed_dim, 3 * head_dim), jnp.float32),
        "b_qkv": std_qkv * jax.random.normal(k2, (1, 3 * head_dim), jnp.float32),
        "w_proj": std_proj * jax.random.normal(k3, (head_dim, embed_dim), jnp.float32),
        "b_proj": std_proj * jax.random.normal(k4, (1, embed_dim), jnp.float32),
    }


# ----------------------------------------------------------------------------
if __name__ == "__main__":
    # Module defaults: embed_dim=48, head_dim=65, qkv_bias=True, dropout=0.0
    B, T = 2, 8            # (batch, num_patches + 1)
    embed_dim, head_dim = 48, 65

    key = jax.random.PRNGKey(0)
    k_x, k_p = jax.random.split(key)
    x = jax.random.normal(k_x, (B, T, embed_dim), jnp.float32)
    params = init_params(k_p, embed_dim=embed_dim, head_dim=head_dim)

    sa_out, sa_prob = transformer_head_forward(x, params, head_dim=head_dim,
                                               batch_block=1)
    jax.block_until_ready((sa_out, sa_prob))

    # shape + numerical check against the pure-JAX reference
    assert sa_out.shape == (B, T, embed_dim)
    assert sa_prob.shape == (B, T, T)
    ref_out, ref_prob = transformer_head_reference(x, params, head_dim=head_dim)
    err_out = float(jnp.max(jnp.abs(sa_out - ref_out)))
    err_prob = float(jnp.max(jnp.abs(sa_prob - ref_prob)))
    assert err_out < 1e-3, f"sa_out mismatch: {err_out}"
    assert err_prob < 1e-3, f"sa_prob mismatch: {err_prob}"

    print("KERNEL_OK")
</pallas_src>

<mosaic_0001>
module attributes {stable_mosaic.version = 11 : i64} {
  func.func @transformer_head_kernel(%arg0: i32, %arg1: memref<1x8x48xf32, #tpu.memory_space<vmem>>, %arg2: memref<48x195xf32, #tpu.memory_space<vmem>>, %arg3: memref<1x195xf32, #tpu.memory_space<vmem>>, %arg4: memref<65x48xf32, #tpu.memory_space<vmem>>, %arg5: memref<1x48xf32, #tpu.memory_space<vmem>>, %arg6: memref<1x8x48xf32, #tpu.memory_space<vmem>>, %arg7: memref<1x8x8xf32, #tpu.memory_space<vmem>>) attributes {dimension_semantics = [#tpu.dimension_semantics<parallel>], iteration_bounds = array<i64: 2>, scalar_prefetch = 0 : i64, scratch_operands = 0 : i64, tpu.core_type = #tpu.core_type<tc>, window_params = [{transform_indices = @transform_0, window_bounds = array<i64: 1, 8, 48>}, {pipeline_mode = #tpu.pipeline_mode<synchronous>, transform_indices = @transform_1, window_bounds = array<i64: 48, 195>}, {pipeline_mode = #tpu.pipeline_mode<synchronous>, transform_indices = @transform_2, window_bounds = array<i64: 1, 195>}, {pipeline_mode = #tpu.pipeline_mode<synchronous>, transform_indices = @transform_3, window_bounds = array<i64: 65, 48>}, {pipeline_mode = #tpu.pipeline_mode<synchronous>, transform_indices = @transform_4, window_bounds = array<i64: 1, 48>}, {transform_indices = @transform_5, window_bounds = array<i64: 1, 8, 48>}, {transform_indices = @transform_6, window_bounds = array<i64: 1, 8, 8>}]} {
    %c0 = arith.constant 0 : index
    %c0_0 = arith.constant 0 : index
    %c0_1 = arith.constant 0 : index
    %0 = vector.load %arg1[%c0, %c0_0, %c0_1] : memref<1x8x48xf32, #tpu.memory_space<vmem>>, vector<1x8x48xf32>
    %1 = vector.shape_cast %0 : vector<1x8x48xf32> to vector<8x48xf32>
    %c0_2 = arith.constant 0 : index
    %c0_3 = arith.constant 0 : index
    %2 = vector.load %arg2[%c0_2, %c0_3] : memref<48x195xf32, #tpu.memory_space<vmem>>, vector<48x195xf32>
    %cst = arith.constant dense<0.000000e+00> : vector<8x195xf32>
    %3 = tpu.matmul %1, %2, %cst {dimension_numbers = #tpu.dot_dimension_numbers<[1], [0], [0], [1], [0, 0, 1, 1], [], []>} : vector<8x48xf32>, vector<48x195xf32>, vector<8x195xf32> -> vector<8x195xf32>
    %c0_4 = arith.constant 0 : index
    %c0_5 = arith.constant 0 : index
    %4 = vector.load %arg3[%c0_4, %c0_5] : memref<1x195xf32, #tpu.memory_space<vmem>>, vector<1x195xf32>
    %5 = vector.broadcast %4 : vector<1x195xf32> to vector<8x195xf32>
    %6 = arith.addf %3, %5 : vector<8x195xf32>
    %7 = vector.shape_cast %6 : vector<8x195xf32> to vector<1x8x195xf32>
    %8 = vector.extract_strided_slice %7 {offsets = [0, 0, 0], sizes = [1, 8, 65], strides = [1, 1, 1]} : vector<1x8x195xf32> to vector<1x8x65xf32>
    %9 = vector.extract_strided_slice %7 {offsets = [0, 0, 65], sizes = [1, 8, 65], strides = [1, 1, 1]} : vector<1x8x195xf32> to vector<1x8x65xf32>
    %10 = vector.extract_strided_slice %7 {offsets = [0, 0, 130], sizes = [1, 8, 65], strides = [1, 1, 1]} : vector<1x8x195xf32> to vector<1x8x65xf32>
    "tpu.trace_start"() <{level = 10 : i32, message = "bqd,bkd->bqk"}> : () -> ()
    %cst_6 = arith.constant dense<0.000000e+00> : vector<1x8x8xf32>
    %11 = tpu.matmul %8, %9, %cst_6 {dimension_numbers = #tpu.dot_dimension_numbers<[2], [2], [1], [1], [0, 0, 0, 1, 1, 1], [0], [0]>} : vector<1x8x65xf32>, vector<1x8x65xf32>, vector<1x8x8xf32> -> vector<1x8x8xf32>
    "tpu.trace_stop"() : () -> ()
    %cst_7 = arith.constant 0.124034733 : f32
    %12 = vector.broadcast %cst_7 : f32 to vector<1x8x8xf32>
    %13 = arith.mulf %11, %12 : vector<1x8x8xf32>
    %cst_8 = arith.constant dense<0xFF800000> : vector<1x8xf32>
    %14 = vector.multi_reduction <maximumf>, %13, %cst_8 [2] : vector<1x8x8xf32> to vector<1x8xf32>
    %cst_9 = arith.constant 0xFF800000 : f32
    %15 = vector.broadcast %cst_9 : f32 to vector<1x8xf32>
    %16 = arith.maximumf %15, %14 : vector<1x8xf32>
    %17 = vector.shape_cast %16 : vector<1x8xf32> to vector<1x8x1xf32>
    %18 = vector.broadcast %17 : vector<1x8x1xf32> to vector<1x8x8xf32>
    %19 = arith.subf %13, %18 : vector<1x8x8xf32>
    %20 = math.exp %19 : vector<1x8x8xf32>
    %cst_10 = arith.constant dense<0.000000e+00> : vector<1x8xf32>
    %21 = vector.multi_reduction <add>, %20, %cst_10 [2] : vector<1x8x8xf32> to vector<1x8xf32>
    %22 = vector.shape_cast %21 : vector<1x8xf32> to vector<1x8x1xf32>
    %23 = vector.broadcast %22 : vector<1x8x1xf32> to vector<1x8x8xf32>
    %24 = arith.divf %20, %23 : vector<1x8x8xf32>
    %c0_11 = arith.constant 0 : index
    %c0_12 = arith.constant 0 : index
    %c0_13 = arith.constant 0 : index
    %25 = vector.load %arg7[%c0_11, %c0_12, %c0_13] : memref<1x8x8xf32, #tpu.memory_space<vmem>>, vector<1x8x8xf32>
    tpu.vector_store %arg7[%c0_11, %c0_12, %c0_13], %24 {strides = array<i32>} : memref<1x8x8xf32, #tpu.memory_space<vmem>>, vector<1x8x8xf32>,
    "tpu.trace_start"() <{level = 10 : i32, message = "bqk,bkd->bqd"}> : () -> ()
    %cst_14 = arith.constant dense<0.000000e+00> : vector<1x8x65xf32>
    %26 = tpu.matmul %24, %10, %cst_14 {dimension_numbers = #tpu.dot_dimension_numbers<[2], [1], [1], [2], [0, 0, 0, 1, 1, 2], [0], [0]>} : vector<1x8x8xf32>, vector<1x8x65xf32>, vector<1x8x65xf32> -> vector<1x8x65xf32>
    "tpu.trace_stop"() : () -> ()
    %27 = vector.shape_cast %26 : vector<1x8x65xf32> to vector<8x65xf32>
    %c0_15 = arith.constant 0 : index
    %c0_16 = arith.constant 0 : index
    %28 = vector.load %arg4[%c0_15, %c0_16] : memref<65x48xf32, #tpu.memory_space<vmem>>, vector<65x48xf32>
    %cst_17 = arith.constant dense<0.000000e+00> : vector<8x48xf32>
    %29 = tpu.matmul %27, %28, %cst_17 {dimension_numbers = #tpu.dot_dimension_numbers<[1], [0], [0], [1], [0, 0, 1, 1], [], []>} : vector<8x65xf32>, vector<65x48xf32>, vector<8x48xf32> -> vector<8x48xf32>
    %c0_18 = arith.constant 0 : index
    %c0_19 = arith.constant 0 : index
    %30 = vector.load %arg5[%c0_18, %c0_19] : memref<1x48xf32, #tpu.memory_space<vmem>>, vector<1x48xf32>
    %31 = vector.broadcast %30 : vector<1x48xf32> to vector<8x48xf32>
    %32 = arith.addf %29, %31 : vector<8x48xf32>
    %33 = vector.shape_cast %32 : vector<8x48xf32> to vector<1x8x48xf32>
    %c0_20 = arith.constant 0 : index
    %c0_21 = arith.constant 0 : index
    %c0_22 = arith.constant 0 : index
    %34 = vector.load %arg6[%c0_20, %c0_21, %c0_22] : memref<1x8x48xf32, #tpu.memory_space<vmem>>, vector<1x8x48xf32>
    tpu.vector_store %arg6[%c0_20, %c0_21, %c0_22], %33 {strides = array<i32>} : memref<1x8x48xf32, #tpu.memory_space<vmem>>, vector<1x8x48xf32>,
    return
  }
  func.func @transform_0(%arg0: i32) -> (i32, i32, i32) {
    %c0_i32 = arith.constant 0 : i32
    %c0_i32_0 = arith.constant 0 : i32
    %c0_i32_1 = arith.constant 0 : i32
    return %arg0, %c0_i32, %c0_i32_0 : i32, i32, i32
  }
  func.func @transform_1(%arg0: i32) -> (i32, i32) {
    %c0_i32 = arith.constant 0 : i32
    %c0_i32_0 = arith.constant 0 : i32
    %c0_i32_1 = arith.constant 0 : i32
    return %c0_i32, %c0_i32_0 : i32, i32
  }
  func.func @transform_2(%arg0: i32) -> (i32, i32) {
    %c0_i32 = arith.constant 0 : i32
    %c0_i32_0 = arith.constant 0 : i32
    %c0_i32_1 = arith.constant 0 : i32
    return %c0_i32, %c0_i32_0 : i32, i32
  }
  func.func @transform_3(%arg0: i32) -> (i32, i32) {
    %c0_i32 = arith.constant 0 : i32
    %c0_i32_0 = arith.constant 0 : i32
    %c0_i32_1 = arith.constant 0 : i32
    return %c0_i32, %c0_i32_0 : i32, i32
  }
  func.func @transform_4(%arg0: i32) -> (i32, i32) {
    %c0_i32 = arith.constant 0 : i32
    %c0_i32_0 = arith.constant 0 : i32
    %c0_i32_1 = arith.constant 0 : i32
    return %c0_i32, %c0_i32_0 : i32, i32
  }
  func.func @transform_5(%arg0: i32) -> (i32, i32, i32) {
    %c0_i32 = arith.constant 0 : i32
    %c0_i32_0 = arith.constant 0 : i32
    %c0_i32_1 = arith.constant 0 : i32
    return %arg0, %c0_i32, %c0_i32_0 : i32, i32, i32
  }
  func.func @transform_6(%arg0: i32) -> (i32, i32, i32) {
    %c0_i32 = arith.constant 0 : i32
    %c0_i32_0 = arith.constant 0 : i32
    %c0_i32_1 = arith.constant 0 : i32
    return %arg0, %c0_i32, %c0_i32_0 : i32, i32, i32
  }
}

</mosaic_0001>

<llo_original>
// kernel: tpu_custom_call.1
$region0: #{tpu_custom_call.1}
  #allocation0 [shape = 'u32[]', space=smem, size = 0x4, offset = 0x4, fixed_abs, tag = 'smem constant byte address 0x4 - core index']
  #allocation1 [shape = 'u32[144,128]{1,0:T(1,128)}', space=vmem, size = 0x12000, scoped, tag = 'internal scratch']
  %s0 = inlined_call_operand.vmem [shape: f32[2,8,48], index: 0, kind: input, shape index: {}]
  %s1 = inlined_call_operand.vmem [shape: f32[48,195], index: 1, kind: input, shape index: {}]
  %s2 = inlined_call_operand.vmem [shape: f32[1,195], index: 2, kind: input, shape index: {}]
  %s3 = inlined_call_operand.vmem [shape: f32[65,48], index: 3, kind: input, shape index: {}]
  %s4 = inlined_call_operand.vmem [shape: f32[1,48], index: 4, kind: input, shape index: {}]
  %s5 = inlined_call_operand.hbm [shape: f32[2,8,48], index: 5, kind: output, shape index: {0}]
  %s6 = inlined_call_operand.hbm [shape: f32[2,8,8], index: 6, kind: output, shape index: {1}]
  %7 = xla_tuple %s5, %s6
  %s8 = sld [smem:[#allocation0]]
  $region61: #{tpu_custom_call.1} parent=0
    _
  %s10 = ssub.s32 1, %s8
  %s11 = scalar_select 0, %s10, %s8
  $region1: #{tpu_custom_call.1} parent=0
    #allocation2 [shape = 'u8[8192]{0}', space=vmem, size = 0x2000, scoped, tag = 'output window, operand 0']
    #allocation3 [shape = 's32[2]{0}', space=sflag, size = 0x8, scoped, tag = 'scoped memory for tpu_custom_call.1']
    #allocation4 [shape = 'u8[8192]{0}', space=vmem, size = 0x2000, scoped, tag = 'output window, operand 1']
    #allocation5 [shape = 's32[2]{0}', space=sflag, size = 0x8, scoped, tag = 'scoped memory for tpu_custom_call.1']
    %12 = vsyncpa [#allocation3], 0
    %s13 = scalar_lea.sflag [#allocation3], 1
    %14 = vsyncpa %s13, 0
    %15 = vsyncpa [#allocation5], 0
    %s16 = scalar_lea.sflag [#allocation5], 1
    %17 = vsyncpa %s16, 0
    loop: start=0, step=1, limit=4
    $region2: #{tpu_custom_call.1} parent=1 // loop_pre_header
      _
    $region3: #{tpu_custom_call.1} parent=1 // loop_header
      %s19 = sphi 0, %s23
      %p20 = scmp.ge.s32.totalorder %s19, 4
      %s29 = sphi 0, %s31
      %s32 = sphi 0, %s29
      %s33 = sphi 0, %s32
      %s49 = sphi 0, %s33
      %s53 = sphi 0, %s53
      %s55 = sphi 0, %s53
      %s56 = sphi 0, %s55
      %s70 = sphi 0, %s56
      %s74 = sphi 0, %s74
      %s76 = sphi 0, %s74
      %s77 = sphi 0, %s76
      %s91 = sphi 0, %s77
      %s95 = sphi 0, %s95
      %s97 = sphi 0, %s95
      %s98 = sphi 0, %s97
      %s112 = sphi 0, %s98
      %s116 = sphi 0, %s116
      %s118 = sphi 0, %s116
      %s119 = sphi 0, %s118
      %s133 = sphi 0, %s119
      %s139 = sphi 0, %s141
      %s142 = sphi 0, %s139
      %s143 = sphi 0, %s142
      %s159 = sphi 0, %s143
      %s165 = sphi 0, %s167
      %s168 = sphi 0, %s165
      %s169 = sphi 0, %s168
      %s185 = sphi 0, %s169
    $region4: #{tpu_custom_call.1} parent=1 // loop_header_branch
      %22 = sbr.rel (%p20) target = $region8
    $region5: #{tpu_custom_call.1} parent=1 // loop_body
      %s24 = ssub.s32 %s19, 1
      %s25 = ssub.s32 %s19, 2
      %s26 = sadd.s32 %s19, 1
      %s27 = ssub.s32 %s19, %s26
      %p28 = scmp.eq.s32.totalorder %s27, 0
      %s30 = sadd.s32 %s29, 1
      %s31 = scalar_select %p28, %s29, %s30
      %p34 = pneg %p28
      %p35 = scmp.eq.s32.totalorder %s19, 1
      %p36 = por %p34, %p35
      %p37 = scmp.ne.s32.totalorder %s29, %s32
      %p38 = scmp.eq.s32.totalorder %s19, 0
      %p39 = por %p37, %p38
      %p40 = scmp.ne.s32.totalorder %s29, %s32
      %p41 = scmp.eq.s32.totalorder %s24, 1
      %p42 = por %p40, %p41
      %p43 = scmp.ne.s32.totalorder %s32, %s33
      %p44 = scmp.eq.s32.totalorder %s24, 0
      %p45 = por %p43, %p44
      %p46 = scmp.ne.s32.totalorder %s32, %s33
      %p47 = scmp.eq.s32.totalorder %s25, 1
      %p48 = por %p46, %p47
      %p50 = scmp.ne.s32.totalorder %s33, %s49
      %p51 = scmp.eq.s32.totalorder %s25, 0
      %p52 = por %p50, %p51
      %s54 = sadd.s32 %s53, 1
      %p57 = scmp.eq.s32.totalorder %s19, 1
      %p58 = scmp.ne.s32.totalorder %s53, %s55
      %p59 = scmp.eq.s32.totalorder %s19, 0
      %p60 = por %p58, %p59
      %p61 = scmp.ne.s32.totalorder %s53, %s55
      %p62 = scmp.eq.s32.totalorder %s24, 1
      %p63 = por %p61, %p62
      %p64 = scmp.ne.s32.totalorder %s55, %s56
      %p65 = scmp.eq.s32.totalorder %s24, 0
      %p66 = por %p64, %p65
      %p67 = scmp.ne.s32.totalorder %s55, %s56
      %p68 = scmp.eq.s32.totalorder %s25, 1
      %p69 = por %p67, %p68
      %p71 = scmp.ne.s32.totalorder %s56, %s70
      %p72 = scmp.eq.s32.totalorder %s25, 0
      %p73 = por %p71, %p72
      %s75 = sadd.s32 %s74, 1
      %p78 = scmp.eq.s32.totalorder %s19, 1
      %p79 = scmp.ne.s32.totalorder %s74, %s76
      %p80 = scmp.eq.s32.totalorder %s19, 0
      %p81 = por %p79, %p80
      %p82 = scmp.ne.s32.totalorder %s74, %s76
      %p83 = scmp.eq.s32.totalorder %s24, 1
      %p84 = por %p82, %p83
      %p85 = scmp.ne.s32.totalorder %s76, %s77
      %p86 = scmp.eq.s32.totalorder %s24, 0
      %p87 = por %p85, %p86
      %p88 = scmp.ne.s32.totalorder %s76, %s77
      %p89 = scmp.eq.s32.totalorder %s25, 1
      %p90 = por %p88, %p89
      %p92 = scmp.ne.s32.totalorder %s77, %s91
      %p93 = scmp.eq.s32.totalorder %s25, 0
      %p94 = por %p92, %p93
      %s96 = sadd.s32 %s95, 1
      %p99 = scmp.eq.s32.totalorder %s19, 1
      %p100 = scmp.ne.s32.totalorder %s95, %s97
      %p101 = scmp.eq.s32.totalorder %s19, 0
      %p102 = por %p100, %p101
      %p103 = scmp.ne.s32.totalorder %s95, %s97
      %p104 = scmp.eq.s32.totalorder %s24, 1
      %p105 = por %p103, %p104
      %p106 = scmp.ne.s32.totalorder %s97, %s98
      %p107 = scmp.eq.s32.totalorder %s24, 0
      %p108 = por %p106, %p107
      %p109 = scmp.ne.s32.totalorder %s97, %s98
      %p110 = scmp.eq.s32.totalorder %s25, 1
      %p111 = por %p109, %p110
      %p113 = scmp.ne.s32.totalorder %s98, %s112
      %p114 = scmp.eq.s32.totalorder %s25, 0
      %p115 = por %p113, %p114
      %s117 = sadd.s32 %s116, 1
      %p120 = scmp.eq.s32.totalorder %s19, 1
      %p121 = scmp.ne.s32.totalorder %s116, %s118
      %p122 = scmp.eq.s32.totalorder %s19, 0
      %p123 = por %p121, %p122
      %p124 = scmp.ne.s32.totalorder %s116, %s118
      %p125 = scmp.eq.s32.totalorder %s24, 1
      %p126 = por %p124, %p125
      %p127 = scmp.ne.s32.totalorder %s118, %s119
      %p128 = scmp.eq.s32.totalorder %s24, 0
      %p129 = por %p127, %p128
      %p130 = scmp.ne.s32.totalorder %s118, %s119
      %p131 = scmp.eq.s32.totalorder %s25, 1
      %p132 = por %p130, %p131
      %p134 = scmp.ne.s32.totalorder %s119, %s133
      %p135 = scmp.eq.s32.totalorder %s25, 0
      %p136 = por %p134, %p135
      %s137 = ssub.s32 %s19, %s26
      %p138 = scmp.eq.s32.totalorder %s137, 0
      %s140 = sadd.s32 %s139, 1
      %s141 = scalar_select %p138, %s139, %s140
      %p144 = pneg %p138
      %p145 = scmp.eq.s32.totalorder %s19, 1
      %p146 = por %p144, %p145
      %p147 = scmp.ne.s32.totalorder %s139, %s142
      %p148 = scmp.eq.s32.totalorder %s19, 0
      %p149 = por %p147, %p148
      %p150 = scmp.ne.s32.totalorder %s139, %s142
      %p151 = scmp.eq.s32.totalorder %s24, 1
      %p152 = por %p150, %p151
      %p153 = scmp.ne.s32.totalorder %s142, %s143
      %p154 = scmp.eq.s32.totalorder %s24, 0
      %p155 = por %p153, %p154
      %p156 = scmp.ne.s32.totalorder %s142, %s143
      %p157 = scmp.eq.s32.totalorder %s25, 1
      %p158 = por %p156, %p157
      %p160 = scmp.ne.s32.totalorder %s143, %s159
      %p161 = scmp.eq.s32.totalorder %s25, 0
      %p162 = por %p160, %p161
      %s163 = ssub.s32 %s19, %s26
      %p164 = scmp.eq.s32.totalorder %s163, 0
      %s166 = sadd.s32 %s165, 1
      %s167 = scalar_select %p164, %s165, %s166
      %p170 = pneg %p164
      %p171 = scmp.eq.s32.totalorder %s19, 1
      %p172 = por %p170, %p171
      %p173 = scmp.ne.s32.totalorder %s165, %s168
      %p174 = scmp.eq.s32.totalorder %s19, 0
      %p175 = por %p173, %p174
      %p176 = scmp.ne.s32.totalorder %s165, %s168
      %p177 = scmp.eq.s32.totalorder %s24, 1
      %p178 = por %p176, %p177
      %p179 = scmp.ne.s32.totalorder %s168, %s169
      %p180 = scmp.eq.s32.totalorder %s24, 0
      %p181 = por %p179, %p180
      %p182 = scmp.ne.s32.totalorder %s168, %s169
      %p183 = scmp.eq.s32.totalorder %s25, 1
      %p184 = por %p182, %p183
      %p186 = scmp.ne.s32.totalorder %s169, %s185
      %p187 = scmp.eq.s32.totalorder %s25, 0
      %p188 = por %p186, %p187
      %p189 = scmp.le.s32.totalorder 1, %s19
      %p190 = scmp.lt.s32.totalorder %s19, 3
      %p191 = pnand %p189, %p190
      %p192 = pneg %p191
      // Predicated region
      $region9: #{tpu_custom_call.1} parent=5 // pred_check
        _
      $region10: #{tpu_custom_call.1} parent=5 // pred_check_branch
        %194 = sbr.rel (%p191) target = $region12
      $region11: #{tpu_custom_call.1} parent=5 // pred_region
        %s195 = ssub.s32 %s19, 1
        // Predicated region
        $region13: #{tpu_custom_call.1} parent=11 // pred_check
          %p196 = pneg %p66
        $region14: #{tpu_custom_call.1} parent=11 // pred_check_branch
          %198 = sbr.rel (%p196) target = $region16
        $region15: #{tpu_custom_call.1} parent=11 // pred_region
          _
        $region16: #{tpu_custom_call.1} parent=11 // pred_fallthru
          _
        // Predicated region
        $region17: #{tpu_custom_call.1} parent=11 // pred_check
          %p199 = pneg %p87
        $region18: #{tpu_custom_call.1} parent=11 // pred_check_branch
          %201 = sbr.rel (%p199) target = $region20
        $region19: #{tpu_custom_call.1} parent=11 // pred_region
          _
        $region20: #{tpu_custom_call.1} parent=11 // pred_fallthru
          _
        // Predicated region
        $region21: #{tpu_custom_call.1} parent=11 // pred_check
          %p202 = pneg %p108
        $region22: #{tpu_custom_call.1} parent=11 // pred_check_branch
          %204 = sbr.rel (%p202) target = $region24
        $region23: #{tpu_custom_call.1} parent=11 // pred_region
          _
        $region24: #{tpu_custom_call.1} parent=11 // pred_fallthru
          _
        // Predicated region
        $region25: #{tpu_custom_call.1} parent=11 // pred_check
          %p205 = pneg %p129
        $region26: #{tpu_custom_call.1} parent=11 // pred_check_branch
          %207 = sbr.rel (%p205) target = $region28
        $region27: #{tpu_custom_call.1} parent=11 // pred_region
          _
        $region28: #{tpu_custom_call.1} parent=11 // pred_fallthru
          _
      $region12: #{tpu_custom_call.1} parent=5 // pred_fallthru
        _
      %p208 = scmp.lt.s32.totalorder %s19, 2
      // Predicated region
      $region29: #{tpu_custom_call.1} parent=5 // pred_check
        %p209 = pneg %p208
      $region30: #{tpu_custom_call.1} parent=5 // pred_check_branch
        %211 = sbr.rel (%p209) target = $region32
      $region31: #{tpu_custom_call.1} parent=5 // pred_region
        // Predicated region
        $region33: #{tpu_custom_call.1} parent=31 // pred_check
          %p212 = pneg %p39
        $region34: #{tpu_custom_call.1} parent=31 // pred_check_branch
          %214 = sbr.rel (%p212) target = $region36
        $region35: #{tpu_custom_call.1} parent=31 // pred_region
          %p215 = scmp.lt.s32.totalorder %s19, 1
          %s216 = scalar_select %p215, %s19, 1
          %s217 = smul.addr %s216, 8
          %s218 = scalar_lea.vmem %s0, %s217
        $region36: #{tpu_custom_call.1} parent=31 // pred_fallthru
          _
      $region32: #{tpu_custom_call.1} parent=5 // pred_fallthru
        _
      %p219 = scmp.le.s32.totalorder 1, %s19
      %p220 = scmp.lt.s32.totalorder %s19, 3
      %p221 = pnand %p219, %p220
      %p222 = pneg %p221
      // Predicated region
      $region37: #{tpu_custom_call.1} parent=5 // pred_check
        _
      $region38: #{tpu_custom_call.1} parent=5 // pred_check_branch
        %224 = sbr.rel (%p221) target = $region40
      $region39: #{tpu_custom_call.1} parent=5 // pred_region
        %s225 = ssub.s32 %s19, 1
        %p226 = scmp.lt.s32.totalorder %s24, 1
        %s227 = scalar_select %p226, %s24, 1
        %s228 = smul.addr %s227, 8
        %s229 = scalar_lea.vmem %s0, %s228
        %p230 = pneg %p45
        %p231 = pneg %p42
        %p232 = pneg %p66
        %p233 = pneg %p63
        %p234 = pneg %p87
        %p235 = pneg %p84
        %p236 = pneg %p108
        %p237 = pneg %p105
        %p238 = pneg %p129
        %p239 = pneg %p126
        %p240 = pneg %p155
        %p241 = pneg %p152
        %s242 = sand.u32 %s142, 1
        %s243 = scalar_lea.sflag [#allocation3], %s242
        %s244 = sand.u32 %s142, 1
        %s245 = smul.addr %s244, 8
        %s246 = scalar_lea.vmem [#allocation2], %s245
        %p247 = pneg %p181
        %p248 = pneg %p178
        %s249 = sand.u32 %s168, 1
        %s250 = scalar_lea.sflag [#allocation5], %s249
        %s251 = sand.u32 %s168, 1
        %s252 = smul.addr %s251, 8
        %s253 = scalar_lea.vmem [#allocation4], %s252
        %p254 = scmp.lt.s32.totalorder %s24, 1
        %s255 = scalar_select %p254, %s24, 1
        %s256 = smul.addr %s255, 8
        %s257 = scalar_lea.vmem %s0, %s256
        %v258 = vld [vmem:[%s257] sm:$0xff]
        %v259 = vld [vmem:[%s1] sm:$0xff]
        %v260 = vld [vmem:[%s1 + $0x8] sm:$0xff]
        %v261 = vld [vmem:[%s1 + $0x10] sm:$0xff]
        %v262 = vld [vmem:[%s1 + $0x18] sm:$0xff]
        %v263 = vld [vmem:[%s1 + $0x20] sm:$0xff]
        %v264 = vld [vmem:[%s1 + $0x28] sm:$0xff]
        %v265 = vld [vmem:[%s1 + $0x30] sm:$0xff]
        %v266 = vld [vmem:[%s1 + $0x38] sm:$0xff]
        %v267 = vld [vmem:[%s1 + $0x40] sm:$0xff]
        %v268 = vld [vmem:[%s1 + $0x48] sm:$0xff]
        %v269 = vld [vmem:[%s1 + $0x50] sm:$0xff]
        %v270 = vld [vmem:[%s1 + $0x58] sm:$0xff]
        %v271 = vld [vmem:[%s2] sm:$0x3]
        %v273 = vlaneseq
        %v274 = vshrl.u32 %v273, 7
        %v275 = vsub.s32 0, %v274
        %v276 = vrot.slane %v271, %v275
        %v277 = vlaneseq
        %v278 = vshrl.u32 %v277, 7
        %v279 = vsub.s32 1, %v278
        %v280 = vrot.slane %v271, %v279
        %vm283 = vcmask 392192
        %v285 = vsel %vm283, %v258, 0
        %287 = vmatprep.subr.mxu0 %v260
        %288 = vmatpush1.msra.mxu0 %v259
        %289 = vmatprep.subr.mxu0 %v262
        %290 = vmatpush1.msra.mxu0 %v261
        %291 = vmatprep.subr.mxu0 %v264
        %292 = vmatpush1.msra.mxu0 %v263
        %293 = vmatprep.subr.mxu0 %v266
        %294 = vmatpush1.msra.mxu0 %v265
        %295 = vmatprep.subr.mxu0 %v268
        %296 = vmatpush1.msra.mxu0 %v267
        %297 = vmatprep.subr.mxu0 %v270
        %298 = vmatpush1.msra.mxu0 %v269
        %299 = vmatprep.subr.mxu0 0.0
        %300 = vmatpush1.msra.mxu0 0.0
        %301 = vmatprep.subr.mxu0 0.0
        %302 = vmatpush1.msra.mxu0 0.0
        %303 = vmatprep.subr.mxu0 0.0
        %304 = vmatpush1.msra.mxu0 0.0
        %305 = vmatprep.subr.mxu0 0.0
        %306 = vmatpush1.msra.mxu0 0.0
        %307 = vmatprep.subr.mxu0 0.0
        %308 = vmatpush1.msra.mxu0 0.0
        %309 = vmatprep.subr.mxu0 0.0
        %310 = vmatpush1.msra.mxu0 0.0
        %311 = vmatprep.subr.mxu0 0.0
        %312 = vmatpush1.msra.mxu0 0.0
        %313 = vmatprep.subr.mxu0 0.0
        %314 = vmatpush1.msra.mxu0 0.0
        %315 = vmatprep.subr.mxu0 0.0
        %316 = vmatpush1.msra.mxu0 0.0
        %317 = vmatprep.subr.mxu0 0.0
        %318 = vmatpush1.msra.mxu0 0.0
        %319 = vmatprep.subr.mxu0 0.0
        %320 = vmatpush1.msra.mxu0 0.0
        %321 = vmatprep.subr.mxu0 0.0
        %322 = vmatpush1.msra.mxu0 0.0
        %323 = vmatprep.subr.mxu0 0.0
        %324 = vmatpush1.msra.mxu0 0.0
        %325 = vmatprep.subr.mxu0 0.0
        %326 = vmatpush1.msra.mxu0 0.0
        %327 = vmatprep.subr.mxu0 0.0
        %328 = vmatpush1.msra.mxu0 0.0
        %329 = vmatprep.subr.mxu0 0.0
        %330 = vmatpush1.msra.mxu0 0.0
        %331 = vmatprep.subr.mxu0 0.0
        %332 = vmatpush1.msra.mxu0 0.0
        %333 = vmatprep.subr.mxu0 0.0
        %334 = vmatpush1.msra.mxu0 0.0
        %335 = vmatprep.subr.mxu0 0.0
        %336 = vmatpush1.msra.mxu0 0.0
        %337 = vmatprep.subr.mxu0 0.0
        %338 = vmatpush1.msra.mxu0 0.0
        %339 = vmatprep.subr.mxu0 0.0
        %340 = vmatpush1.msra.mxu0 0.0
        %341 = vmatprep.subr.mxu0 0.0
        %342 = vmatpush1.msra.mxu0 0.0
        %343 = vmatprep.subr.mxu0 0.0
        %344 = vmatpush1.msra.mxu0 0.0
        %345 = vmatprep.subr.mxu0 0.0
        %346 = vmatpush1.msra.mxu0 0.0
        %347 = vmatprep.subr.mxu0 0.0
        %348 = vmatpush1.msra.mxu0 0.0
        %349 = vmatprep.subr.mxu0 0.0
        %350 = vmatpush1.msra.mxu0 0.0
        %351 = vmatprep.mubr.f32.mxu0 0.0
        %352 = vmatmul.mubr.f32.gmra.mrb[0].mxu0 %v285
        %v353 = vpop.f32.mrb[0].mxu0
        %v354 = vadd.f32 %v276, %v353
        %v355 = vpop.f32.mrb[0].mxu0
        %v356 = vadd.f32 %v280, %v355
        %357 = vdwg.mxu0
        %360 = vrot.lane.b32.xlu0 %v354, 63
        %v361 = vpop.permute.xlu0 %360
        %362 = vrot.lane.b32.xlu0 %v356, 63
        %v363 = vpop.permute.xlu0 %362
        %vm364 = vcmask 515072
        %v365 = vsel %vm364, %v361, %v363
        %vm366 = vcmask 531456
        %v367 = vsel %vm366, %v354, 0
        %v369 = vsel %vm366, %v365, 0
        %371 = vmatprep.subr.mxu0 0.0
        %372 = vmatpush1.xpose.msra.mxu0 %v369
        %373 = vmatprep.subr.mxu0 0.0
        %374 = vmatpush1.xpose.msra.mxu0 0.0
        %375 = vmatprep.subr.mxu0 0.0
        %376 = vmatpush1.xpose.msra.mxu0 0.0
        %377 = vmatprep.subr.mxu0 0.0
        %378 = vmatpush1.xpose.msra.mxu0 0.0
        %379 = vmatprep.subr.mxu0 0.0
        %380 = vmatpush1.xpose.msra.mxu0 0.0
        %381 = vmatprep.subr.mxu0 0.0
        %382 = vmatpush1.xpose.msra.mxu0 0.0
        %383 = vmatprep.subr.mxu0 0.0
        %384 = vmatpush1.xpose.msra.mxu0 0.0
        %385 = vmatprep.subr.mxu0 0.0
        %386 = vmatpush1.xpose.msra.mxu0 0.0
        %387 = vmatprep.subr.mxu0 0.0
        %388 = vmatpush1.xpose.msra.mxu0 0.0
        %389 = vmatprep.subr.mxu0 0.0
        %390 = vmatpush1.xpose.msra.mxu0 0.0
        %391 = vmatprep.subr.mxu0 0.0
        %392 = vmatpush1.xpose.msra.mxu0 0.0
        %393 = vmatprep.subr.mxu0 0.0
        %394 = vmatpush1.xpose.msra.mxu0 0.0
        %395 = vmatprep.subr.mxu0 0.0
        %396 = vmatpush1.xpose.msra.mxu0 0.0
        %397 = vmatprep.subr.mxu0 0.0
        %398 = vmatpush1.xpose.msra.mxu0 0.0
        %399 = vmatprep.subr.mxu0 0.0
        %400 = vmatpush1.xpose.msra.mxu0 0.0
        %401 = vmatprep.subr.mxu0 0.0
        %402 = vmatpush1.xpose.msra.mxu0 0.0
        %403 = vmatprep.subr.mxu0 0.0
        %404 = vmatpush1.xpose.msra.mxu0 0.0
        %405 = vmatprep.subr.mxu0 0.0
        %406 = vmatpush1.xpose.msra.mxu0 0.0
        %407 = vmatprep.subr.mxu0 0.0
        %408 = vmatpush1.xpose.msra.mxu0 0.0
        %409 = vmatprep.subr.mxu0 0.0
        %410 = vmatpush1.xpose.msra.mxu0 0.0
        %411 = vmatprep.subr.mxu0 0.0
        %412 = vmatpush1.xpose.msra.mxu0 0.0
        %413 = vmatprep.subr.mxu0 0.0
        %414 = vmatpush1.xpose.msra.mxu0 0.0
        %415 = vmatprep.subr.mxu0 0.0
        %416 = vmatpush1.xpose.msra.mxu0 0.0
        %417 = vmatprep.subr.mxu0 0.0
        %418 = vmatpush1.xpose.msra.mxu0 0.0
        %419 = vmatprep.subr.mxu0 0.0
        %420 = vmatpush1.xpose.msra.mxu0 0.0
        %421 = vmatprep.subr.mxu0 0.0
        %422 = vmatpush1.xpose.msra.mxu0 0.0
        %423 = vmatprep.subr.mxu0 0.0
        %424 = vmatpush1.xpose.msra.mxu0 0.0
        %425 = vmatprep.subr.mxu0 0.0
        %426 = vmatpush1.xpose.msra.mxu0 0.0
        %427 = vmatprep.subr.mxu0 0.0
        %428 = vmatpush1.xpose.msra.mxu0 0.0
        %429 = vmatprep.subr.mxu0 0.0
        %430 = vmatpush1.xpose.msra.mxu0 0.0
        %431 = vmatprep.subr.mxu0 0.0
        %432 = vmatpush1.xpose.msra.mxu0 0.0
        %433 = vmatprep.subr.mxu0 0.0
        %434 = vmatpush1.xpose.msra.mxu0 0.0
        %435 = vmatprep.mubr.f32.mxu0 0.0
        %436 = vmatmul.mubr.f32.gmra.mrb[0].mxu0 %v367
        %v437 = vpop.f32.mrb[0].mxu0
        %v438 = vadd.f32 0.0, %v437
        %v439 = vpop.f32.mrb[0].mxu0
        %440 = vdwg.mxu0
        %v441 = vmul.f32 %v438, 0.12403473
        %vm442 = vcmask 64512
        %v443 = vsel %vm442, %v441, -inf
        %444 = vmax.xlane.f32.xlu0 %v443
        %v445 = vpop.xlane.xlu0 %444
        %v446 = vsub.f32 %v441, %v445
        %v447 = vmul.f32 %v446, 1.442695
        %v448 = vpow.pop %v447
        %v449 = vsel %vm442, %v448, 0.0
        %450 = vadd.xlane.f32.xlu0 %v449
        %v451 = vpop.xlane.xlu0 %450
        %v452 = vrcp.pop %v451
        %v453 = vmul.f32 %v448, %v452
        %454 = vst.msk [vmem:[%s253] sm:$0xff] %vm442, %v453
        %455 = vrot.lane.b32.xlu0 %v356, 126
        %v456 = vpop.permute.xlu0 %455
        %v459 = vsel %vm442, %v453, 0
        %461 = vmatprep.subr.mxu0 0.0
        %462 = vmatpush1.msra.mxu0 %v456
        %463 = vmatprep.subr.mxu0 0.0
        %464 = vmatpush1.msra.mxu0 0.0
        %465 = vmatprep.subr.mxu0 0.0
        %466 = vmatpush1.msra.mxu0 0.0
        %467 = vmatprep.subr.mxu0 0.0
        %468 = vmatpush1.msra.mxu0 0.0
        %469 = vmatprep.subr.mxu0 0.0
        %470 = vmatpush1.msra.mxu0 0.0
        %471 = vmatprep.subr.mxu0 0.0
        %472 = vmatpush1.msra.mxu0 0.0
        %473 = vmatprep.subr.mxu0 0.0
        %474 = vmatpush1.msra.mxu0 0.0
        %475 = vmatprep.subr.mxu0 0.0
        %476 = vmatpush1.msra.mxu0 0.0
        %477 = vmatprep.subr.mxu0 0.0
        %478 = vmatpush1.msra.mxu0 0.0
        %479 = vmatprep.subr.mxu0 0.0
        %480 = vmatpush1.msra.mxu0 0.0
        %481 = vmatprep.subr.mxu0 0.0
        %482 = vmatpush1.msra.mxu0 0.0
        %483 = vmatprep.subr.mxu0 0.0
        %484 = vmatpush1.msra.mxu0 0.0
        %485 = vmatprep.subr.mxu0 0.0
        %486 = vmatpush1.msra.mxu0 0.0
        %487 = vmatprep.subr.mxu0 0.0
        %488 = vmatpush1.msra.mxu0 0.0
        %489 = vmatprep.subr.mxu0 0.0
        %490 = vmatpush1.msra.mxu0 0.0
        %491 = vmatprep.subr.mxu0 0.0
        %492 = vmatpush1.msra.mxu0 0.0
        %493 = vmatprep.subr.mxu0 0.0
        %494 = vmatpush1.msra.mxu0 0.0
        %495 = vmatprep.subr.mxu0 0.0
        %496 = vmatpush1.msra.mxu0 0.0
        %497 = vmatprep.subr.mxu0 0.0
        %498 = vmatpush1.msra.mxu0 0.0
        %499 = vmatprep.subr.mxu0 0.0
        %500 = vmatpush1.msra.mxu0 0.0
        %501 = vmatprep.subr.mxu0 0.0
        %502 = vmatpush1.msra.mxu0 0.0
        %503 = vmatprep.subr.mxu0 0.0
        %504 = vmatpush1.msra.mxu0 0.0
        %505 = vmatprep.subr.mxu0 0.0
        %506 = vmatpush1.msra.mxu0 0.0
        %507 = vmatprep.subr.mxu0 0.0
        %508 = vmatpush1.msra.mxu0 0.0
        %509 = vmatprep.subr.mxu0 0.0
        %510 = vmatpush1.msra.mxu0 0.0
        %511 = vmatprep.subr.mxu0 0.0
        %512 = vmatpush1.msra.mxu0 0.0
        %513 = vmatprep.subr.mxu0 0.0
        %514 = vmatpush1.msra.mxu0 0.0
        %515 = vmatprep.subr.mxu0 0.0
        %516 = vmatpush1.msra.mxu0 0.0
        %517 = vmatprep.subr.mxu0 0.0
        %518 = vmatpush1.msra.mxu0 0.0
        %519 = vmatprep.subr.mxu0 0.0
        %520 = vmatpush1.msra.mxu0 0.0
        %521 = vmatprep.subr.mxu0 0.0
        %522 = vmatpush1.msra.mxu0 0.0
        %523 = vmatprep.subr.mxu0 0.0
        %524 = vmatpush1.msra.mxu0 0.0
        %525 = vmatprep.mubr.f32.mxu0 0.0
        %526 = vmatmul.mubr.f32.gmra.mrb[0].mxu0 %v459
        %v527 = vpop.f32.mrb[0].mxu0
        %v528 = vadd.f32 0.0, %v527
        %v529 = vpop.f32.mrb[0].mxu0
        %530 = vdwg.mxu0
        %v531 = vld [vmem:[%s3] sm:$0xff]
        %v532 = vld [vmem:[%s3 + $0x8] sm:$0xff]
        %v533 = vld [vmem:[%s3 + $0x10] sm:$0xff]
        %v534 = vld [vmem:[%s3 + $0x18] sm:$0xff]
        %v535 = vld [vmem:[%s3 + $0x20] sm:$0xff]
        %v536 = vld [vmem:[%s3 + $0x28] sm:$0xff]
        %v537 = vld [vmem:[%s3 + $0x30] sm:$0xff]
        %v538 = vld [vmem:[%s3 + $0x38] sm:$0xff]
        %v539 = vld [vmem:[%s3 + $0x40] sm:$0x1]
        %v540 = vld [vmem:[%s4] sm:$0x1]
        %v542 = vlaneseq
        %v543 = vshrl.u32 %v542, 7
        %v544 = vsub.s32 0, %v543
        %v545 = vrot.slane %v540, %v544
        %v548 = vsel %vm366, %v528, 0
        %vm550 = vcmask 1040384
        %v552 = vsel %vm550, %v539, 0
        %554 = vmatprep.subr.mxu0 0.0
        %555 = vmatpush1.msra.mxu0 %v531
        %556 = vmatprep.subr.mxu0 0.0
        %557 = vmatpush1.msra.mxu0 %v532
        %558 = vmatprep.subr.mxu0 0.0
        %559 = vmatpush1.msra.mxu0 %v533
        %560 = vmatprep.subr.mxu0 0.0
        %561 = vmatpush1.msra.mxu0 %v534
        %562 = vmatprep.subr.mxu0 0.0
        %563 = vmatpush1.msra.mxu0 %v535
        %564 = vmatprep.subr.mxu0 0.0
        %565 = vmatpush1.msra.mxu0 %v536
        %566 = vmatprep.subr.mxu0 0.0
        %567 = vmatpush1.msra.mxu0 %v537
        %568 = vmatprep.subr.mxu0 0.0
        %569 = vmatpush1.msra.mxu0 %v538
        %570 = vmatprep.subr.mxu0 0.0
        %571 = vmatpush1.msra.mxu0 %v552
        %572 = vmatprep.subr.mxu0 0.0
        %573 = vmatpush1.msra.mxu0 0.0
        %574 = vmatprep.subr.mxu0 0.0
        %575 = vmatpush1.msra.mxu0 0.0
        %576 = vmatprep.subr.mxu0 0.0
        %577 = vmatpush1.msra.mxu0 0.0
        %578 = vmatprep.subr.mxu0 0.0
        %579 = vmatpush1.msra.mxu0 0.0
        %580 = vmatprep.subr.mxu0 0.0
        %581 = vmatpush1.msra.mxu0 0.0
        %582 = vmatprep.subr.mxu0 0.0
        %583 = vmatpush1.msra.mxu0 0.0
        %584 = vmatprep.subr.mxu0 0.0
        %585 = vmatpush1.msra.mxu0 0.0
        %586 = vmatprep.subr.mxu0 0.0
        %587 = vmatpush1.msra.mxu0 0.0
        %588 = vmatprep.subr.mxu0 0.0
        %589 = vmatpush1.msra.mxu0 0.0
        %590 = vmatprep.subr.mxu0 0.0
        %591 = vmatpush1.msra.mxu0 0.0
        %592 = vmatprep.subr.mxu0 0.0
        %593 = vmatpush1.msra.mxu0 0.0
        %594 = vmatprep.subr.mxu0 0.0
        %595 = vmatpush1.msra.mxu0 0.0
        %596 = vmatprep.subr.mxu0 0.0
        %597 = vmatpush1.msra.mxu0 0.0
        %598 = vmatprep.subr.mxu0 0.0
        %599 = vmatpush1.msra.mxu0 0.0
        %600 = vmatprep.subr.mxu0 0.0
        %601 = vmatpush1.msra.mxu0 0.0
        %602 = vmatprep.subr.mxu0 0.0
        %603 = vmatpush1.msra.mxu0 0.0
        %604 = vmatprep.subr.mxu0 0.0
        %605 = vmatpush1.msra.mxu0 0.0
        %606 = vmatprep.subr.mxu0 0.0
        %607 = vmatpush1.msra.mxu0 0.0
        %608 = vmatprep.subr.mxu0 0.0
        %609 = vmatpush1.msra.mxu0 0.0
        %610 = vmatprep.subr.mxu0 0.0
        %611 = vmatpush1.msra.mxu0 0.0
        %612 = vmatprep.subr.mxu0 0.0
        %613 = vmatpush1.msra.mxu0 0.0
        %614 = vmatprep.subr.mxu0 0.0
        %615 = vmatpush1.msra.mxu0 0.0
        %616 = vmatprep.subr.mxu0 0.0
        %617 = vmatpush1.msra.mxu0 0.0
        %618 = vmatprep.mubr.f32.mxu0 0.0
        %619 = vmatmul.mubr.f32.gmra.mrb[0].mxu0 %v548
        %v620 = vpop.f32.mrb[0].mxu0
        %v621 = vadd.f32 %v545, %v620
        %v622 = vpop.f32.mrb[0].mxu0
        %623 = vdwg.mxu0
        %624 = vst.msk [vmem:[%s246] sm:$0xff] %vm283, %v621
        %s625 = sand.u32 %s142, 1
        %s626 = scalar_lea.sflag [#allocation3], %s625
        %s627 = sand.u32 %s142, 1
        %s628 = smul.addr %s627, 8
        %s629 = scalar_lea.vmem [#allocation2], %s628
        %s630 = sand.u32 %s168, 1
        %s631 = scalar_lea.sflag [#allocation5], %s630
        %s632 = sand.u32 %s168, 1
        %s633 = smul.addr %s632, 8
        %s634 = scalar_lea.vmem [#allocation4], %s633
        // Predicated region
        $region41: #{tpu_custom_call.1} parent=39 // pred_check
          %p635 = pneg %p152
        $region42: #{tpu_custom_call.1} parent=39 // pred_check_branch
          %637 = sbr.rel (%p635) target = $region44
        $region43: #{tpu_custom_call.1} parent=39 // pred_region
          %s639 = ssub.s32 128, 128
          %640 = vsyncadd %s626, %s639
          %s641 = smul.addr %s24, 128
          %s642 = scalar_lea.hbm %s5, %s641
          %s644 = sshll.u32 %s629, 4
          %s645 = int_to_ptr.vmem [resolvable:$true] %s644
          %647 = dma.vmem_to_hbm [thread:$0]  %s645, 128, %s642, %s626
        $region44: #{tpu_custom_call.1} parent=39 // pred_fallthru
          _
        // Predicated region
        $region45: #{tpu_custom_call.1} parent=39 // pred_check
          %p648 = pneg %p178
        $region46: #{tpu_custom_call.1} parent=39 // pred_check_branch
          %650 = sbr.rel (%p648) target = $region48
        $region47: #{tpu_custom_call.1} parent=39 // pred_region
          %s652 = ssub.s32 128, 128
          %653 = vsyncadd %s631, %s652
          %s654 = smul.addr %s24, 128
          %s655 = scalar_lea.hbm %s6, %s654
          %s657 = sshll.u32 %s634, 4
          %s658 = int_to_ptr.vmem [resolvable:$true] %s657
          %660 = dma.vmem_to_hbm [thread:$0]  %s658, 128, %s655, %s631
        $region48: #{tpu_custom_call.1} parent=39 // pred_fallthru
          _
      $region40: #{tpu_custom_call.1} parent=5 // pred_fallthru
        _
      %p661 = scmp.le.s32.totalorder 2, %s19
      // Predicated region
      $region49: #{tpu_custom_call.1} parent=5 // pred_check
        %p662 = pneg %p661
      $region50: #{tpu_custom_call.1} parent=5 // pred_check_branch
        %664 = sbr.rel (%p662) target = $region52
      $region51: #{tpu_custom_call.1} parent=5 // pred_region
        %s665 = ssub.s32 %s19, 2
        // Predicated region
        $region53: #{tpu_custom_call.1} parent=51 // pred_check
          %p666 = pneg %p158
        $region54: #{tpu_custom_call.1} parent=51 // pred_check_branch
          %668 = sbr.rel (%p666) target = $region56
        $region55: #{tpu_custom_call.1} parent=51 // pred_region
          %s669 = sand.u32 %s143, 1
          %s670 = scalar_lea.sflag [#allocation3], %s669
          %s671 = sand.u32 %s143, 1
          %s672 = smul.addr %s671, 8
          %s673 = scalar_lea.vmem [#allocation2], %s672
          %674 = dma.done %s670, 128
        $region56: #{tpu_custom_call.1} parent=51 // pred_fallthru
          _
        // Predicated region
        $region57: #{tpu_custom_call.1} parent=51 // pred_check
          %p675 = pneg %p184
        $region58: #{tpu_custom_call.1} parent=51 // pred_check_branch
          %677 = sbr.rel (%p675) target = $region60
        $region59: #{tpu_custom_call.1} parent=51 // pred_region
          %s678 = sand.u32 %s169, 1
          %s679 = scalar_lea.sflag [#allocation5], %s678
          %s680 = sand.u32 %s169, 1
          %s681 = smul.addr %s680, 8
          %s682 = scalar_lea.vmem [#allocation4], %s681
          %683 = dma.done %s679, 128
        $region60: #{tpu_custom_call.1} parent=51 // pred_fallthru
          _
      $region52: #{tpu_custom_call.1} parent=5 // pred_fallthru
        _
    $region6: #{tpu_custom_call.1} parent=1 // loop_footer
      %s23 = sadd.s32 1, %s19
    $region7: #{tpu_custom_call.1} parent=1 // loop_footer_branch
      %18 = sbr.rel target = $region3
    $region8: #{tpu_custom_call.1} parent=1 // loop_exit
      _
    %684 = vsyncpa [#allocation3], 1
    %s685 = scalar_lea.sflag [#allocation3], 1
    %686 = vsyncpa %s685, 1
    %687 = vsyncpa [#allocation5], 1
    %s688 = scalar_lea.sflag [#allocation5], 1
    %689 = vsyncpa %s688, 1

</llo_original>
